<compile_context>
chip_gen: v7x
topology: tpu7x:2x2x1
jax: 0.10.0
libtpu: 0.0.40
codegen_flags: <defaults>
</compile_context>

<pallas_src>
import jax
import jax.numpy as jnp
from jax.experimental import pallas as pl
from jax.experimental.pallas import tpu as pltpu


def _se_kernel(x_ref, w1t_ref, w2t_ref, o_ref):
    # x_ref / o_ref: (1, HW, C)   channels on the lane axis
    # w1t_ref:       (C, Cr)      fc1 weight, pre-transposed to (in, out), f32
    # w2t_ref:       (Cr, C)      fc2 weight, pre-transposed to (in, out), f32

    # AdaptiveMaxPool2d(1): global max over spatial (sublane axis) -> (1, C).
    pooled = jnp.max(x_ref[0], axis=0, keepdims=True)

    # Excite: two tiny 1x1 "convs" as matmuls, f32 accumulation (FLOPs are
    # noise next to the HBM streaming of x).
    h = jnp.dot(pooled.astype(jnp.float32), w1t_ref[...],
                preferred_element_type=jnp.float32)                 # (1, Cr)
    h = jnp.maximum(h, 0.0)
    s = jnp.dot(h, w2t_ref[...], preferred_element_type=jnp.float32)  # (1, C)
    s = jax.nn.sigmoid(s)

    # Scale: re-read x from VMEM (don't keep the full tile live across the
    # excite step); broadcast s over the spatial/sublane axis.
    o_ref[0] = x_ref[0] * s.astype(o_ref.dtype)


@jax.jit
def se_module(x_nchw, w1, w2):
    """SE forward. x_nchw: (B, C, H, W); w1: (Cr, C, 1, 1); w2: (C, Cr, 1, 1)."""
    B, C, H, W = x_nchw.shape
    Cr = w1.shape[0]
    HW = H * W

    # Lane-dense in-kernel layout: (B, HW, C), channels on lanes.
    x3 = jnp.transpose(x_nchw.reshape(B, C, HW), (0, 2, 1))
    w1t = w1.reshape(Cr, C).T.astype(jnp.float32)   # (C, Cr)
    w2t = w2.reshape(C, Cr).T.astype(jnp.float32)   # (Cr, C)

    out = pl.pallas_call(
        _se_kernel,
        out_shape=jax.ShapeDtypeStruct((B, HW, C), x_nchw.dtype),
        grid=(B,),
        in_specs=[
            pl.BlockSpec((1, HW, C), lambda b: (b, 0, 0)),
            pl.BlockSpec((C, Cr), lambda b: (0, 0)),
            pl.BlockSpec((Cr, C), lambda b: (0, 0)),
        ],
        out_specs=pl.BlockSpec((1, HW, C), lambda b: (b, 0, 0)),
        input_output_aliases={0: 0},   # x3 is an intermediate -> write in place
        compiler_params=pltpu.CompilerParams(
            dimension_semantics=("parallel",),
            vmem_limit_bytes=48 * 1024 * 1024,
        ),
    )(x3, w1t, w2t)

    return jnp.transpose(out, (0, 2, 1)).reshape(B, C, H, W)


def se_module_ref(x_nchw, w1, w2):
    """Plain-JAX reference mirroring the PyTorch forward."""
    B, C, H, W = x_nchw.shape
    Cr = w1.shape[0]
    pooled = jnp.max(x_nchw.reshape(B, C, -1), axis=-1)          # (B, C)
    h = jnp.maximum(pooled @ w1.reshape(Cr, C).T, 0.0)           # (B, Cr)
    s = jax.nn.sigmoid(h @ w2.reshape(C, Cr).T)                  # (B, C)
    return x_nchw * s[:, :, None, None]


if __name__ == "__main__":
    B, C, H, W = 2, 4, 16, 16
    reduction = 2
    Cr = C // reduction

    key = jax.random.PRNGKey(0)
    kx, k1, k2 = jax.random.split(key, 3)

    x = jax.random.normal(kx, (B, C, H, W), dtype=jnp.float32)
    # Deterministic, Kaiming-ish scaled 1x1 conv weights (no bias).
    w1 = jax.random.normal(k1, (Cr, C, 1, 1), dtype=jnp.float32) * (1.0 / C) ** 0.5
    w2 = jax.random.normal(k2, (C, Cr, 1, 1), dtype=jnp.float32) * (1.0 / Cr) ** 0.5

    ref = se_module_ref(x, w1, w2)

    # f32 path: exact match vs reference.
    out = jax.block_until_ready(se_module(x, w1, w2))
    assert out.shape == (B, C, H, W)
    assert out.dtype == x.dtype
    assert jnp.allclose(out, ref, atol=1e-5, rtol=1e-5)

    # bf16 activations: same kernel, half the HBM streaming bytes.
    out_bf16 = jax.block_until_ready(se_module(x.astype(jnp.bfloat16), w1, w2))
    assert out_bf16.dtype == jnp.bfloat16
    assert jnp.allclose(out_bf16.astype(jnp.float32), ref, atol=5e-2, rtol=5e-2)

    print("KERNEL_OK")
</pallas_src>

<mosaic_0001>
module attributes {stable_mosaic.version = 11 : i64} {
  func.func @_se_kernel(%arg0: i32, %arg1: memref<1x256x4xf32, #tpu.memory_space<vmem>>, %arg2: memref<4x2xf32, #tpu.memory_space<vmem>>, %arg3: memref<2x4xf32, #tpu.memory_space<vmem>>, %arg4: memref<1x256x4xf32, #tpu.memory_space<vmem>>) attributes {dimension_semantics = [#tpu.dimension_semantics<parallel>], iteration_bounds = array<i64: 2>, scalar_prefetch = 0 : i64, scratch_operands = 0 : i64, tpu.core_type = #tpu.core_type<tc>, window_params = [{transform_indices = @transform_0, window_bounds = array<i64: 1, 256, 4>}, {pipeline_mode = #tpu.pipeline_mode<synchronous>, transform_indices = @transform_1, window_bounds = array<i64: 4, 2>}, {pipeline_mode = #tpu.pipeline_mode<synchronous>, transform_indices = @transform_2, window_bounds = array<i64: 2, 4>}, {transform_indices = @transform_3, window_bounds = array<i64: 1, 256, 4>}]} {
    %c0 = arith.constant 0 : index
    %c0_0 = arith.constant 0 : index
    %c0_1 = arith.constant 0 : index
    %0 = vector.load %arg1[%c0, %c0_0, %c0_1] : memref<1x256x4xf32, #tpu.memory_space<vmem>>, vector<1x256x4xf32>
    %1 = vector.shape_cast %0 : vector<1x256x4xf32> to vector<256x4xf32>
    %cst = arith.constant dense<0xFF800000> : vector<4xf32>
    %2 = vector.multi_reduction <maximumf>, %1, %cst [0] : vector<256x4xf32> to vector<4xf32>
    %3 = vector.shape_cast %2 : vector<4xf32> to vector<1x4xf32>
    %c0_2 = arith.constant 0 : index
    %c0_3 = arith.constant 0 : index
    %4 = vector.load %arg2[%c0_2, %c0_3] : memref<4x2xf32, #tpu.memory_space<vmem>>, vector<4x2xf32>
    %cst_4 = arith.constant dense<0.000000e+00> : vector<1x2xf32>
    %5 = tpu.matmul %3, %4, %cst_4 {dimension_numbers = #tpu.dot_dimension_numbers<[1], [0], [0], [1], [0, 0, 1, 1], [], []>} : vector<1x4xf32>, vector<4x2xf32>, vector<1x2xf32> -> vector<1x2xf32>
    %cst_5 = arith.constant 0.000000e+00 : f32
    %6 = vector.broadcast %cst_5 : f32 to vector<1x2xf32>
    %7 = arith.maximumf %5, %6 : vector<1x2xf32>
    %c0_6 = arith.constant 0 : index
    %c0_7 = arith.constant 0 : index
    %8 = vector.load %arg3[%c0_6, %c0_7] : memref<2x4xf32, #tpu.memory_space<vmem>>, vector<2x4xf32>
    %cst_8 = arith.constant dense<0.000000e+00> : vector<1x4xf32>
    %9 = tpu.matmul %7, %8, %cst_8 {dimension_numbers = #tpu.dot_dimension_numbers<[1], [0], [0], [1], [0, 0, 1, 1], [], []>} : vector<1x2xf32>, vector<2x4xf32>, vector<1x4xf32> -> vector<1x4xf32>
    %10 = arith.negf %9 : vector<1x4xf32>
    %11 = math.exp %10 : vector<1x4xf32>
    %cst_9 = arith.constant 1.000000e+00 : f32
    %12 = vector.broadcast %cst_9 : f32 to vector<1x4xf32>
    %13 = arith.addf %12, %11 : vector<1x4xf32>
    %14 = arith.divf %12, %13 : vector<1x4xf32>
    %c0_10 = arith.constant 0 : index
    %c0_11 = arith.constant 0 : index
    %c0_12 = arith.constant 0 : index
    %15 = vector.load %arg1[%c0_10, %c0_11, %c0_12] : memref<1x256x4xf32, #tpu.memory_space<vmem>>, vector<1x256x4xf32>
    %16 = vector.shape_cast %15 : vector<1x256x4xf32> to vector<256x4xf32>
    %17 = vector.broadcast %14 : vector<1x4xf32> to vector<256x4xf32>
    %18 = arith.mulf %16, %17 : vector<256x4xf32>
    %c0_13 = arith.constant 0 : index
    %c0_14 = arith.constant 0 : index
    %c0_15 = arith.constant 0 : index
    %19 = vector.load %arg4[%c0_13, %c0_14, %c0_15] : memref<1x256x4xf32, #tpu.memory_space<vmem>>, vector<1x256x4xf32>
    %20 = vector.shape_cast %19 : vector<1x256x4xf32> to vector<256x4xf32>
    %21 = vector.shape_cast %18 : vector<256x4xf32> to vector<1x256x4xf32>
    tpu.vector_store %arg4[%c0_13, %c0_14, %c0_15], %21 {strides = array<i32>} : memref<1x256x4xf32, #tpu.memory_space<vmem>>, vector<1x256x4xf32>,
    return
  }
  func.func @transform_0(%arg0: i32) -> (i32, i32, i32) {
    %c0_i32 = arith.constant 0 : i32
    %c0_i32_0 = arith.constant 0 : i32
    %c0_i32_1 = arith.constant 0 : i32
    return %arg0, %c0_i32, %c0_i32_0 : i32, i32, i32
  }
  func.func @transform_1(%arg0: i32) -> (i32, i32) {
    %c0_i32 = arith.constant 0 : i32
    %c0_i32_0 = arith.constant 0 : i32
    %c0_i32_1 = arith.constant 0 : i32
    return %c0_i32, %c0_i32_0 : i32, i32
  }
  func.func @transform_2(%arg0: i32) -> (i32, i32) {
    %c0_i32 = arith.constant 0 : i32
    %c0_i32_0 = arith.constant 0 : i32
    %c0_i32_1 = arith.constant 0 : i32
    return %c0_i32, %c0_i32_0 : i32, i32
  }
  func.func @transform_3(%arg0: i32) -> (i32, i32, i32) {
    %c0_i32 = arith.constant 0 : i32
    %c0_i32_0 = arith.constant 0 : i32
    %c0_i32_1 = arith.constant 0 : i32
    return %arg0, %c0_i32, %c0_i32_0 : i32, i32, i32
  }
}

</mosaic_0001>

<llo_original>
// kernel: se_module.1
$region0: #{se_module.1}
  #allocation0 [shape = 'u32[]', space=smem, size = 0x4, offset = 0x4, fixed_abs, tag = 'smem constant byte address 0x4 - core index']
  #allocation1 [shape = 'u32[144,128]{1,0:T(1,128)}', space=vmem, size = 0x12000, scoped, tag = 'internal scratch']
  %s0 = inlined_call_operand.vmem [shape: f32[2,256,4], index: 0, kind: input, shape index: {}, may-alias: {0,3}]
  %s1 = inlined_call_operand.vmem [shape: f32[4,2], index: 1, kind: input, shape index: {}]
  %s2 = inlined_call_operand.vmem [shape: f32[2,4], index: 2, kind: input, shape index: {}]
  %s3 = inlined_call_operand.vmem [shape: f32[2,256,4], index: 3, kind: output, shape index: {}, may-alias: {0,3}]
  %s4 = sld [smem:[#allocation0]]
  $region45: #{se_module.1} parent=0
    _
  %s6 = ssub.s32 1, %s4
  %s7 = scalar_select 0, %s6, %s4
  loop: start=0, step=1, limit=4
  $region2: #{se_module.1} parent=0 // loop_pre_header
    _
  $region3: #{se_module.1} parent=0 // loop_header
    %s9 = sphi 0, %s13
    %p10 = scmp.ge.s32.totalorder %s9, 4
    %s19 = sphi 0, %s21
    %s22 = sphi 0, %s19
    %s23 = sphi 0, %s22
    %s39 = sphi 0, %s23
    %s43 = sphi 0, %s43
    %s45 = sphi 0, %s43
    %s46 = sphi 0, %s45
    %s60 = sphi 0, %s46
    %s64 = sphi 0, %s64
    %s66 = sphi 0, %s64
    %s67 = sphi 0, %s66
    %s81 = sphi 0, %s67
    %s87 = sphi 0, %s89
    %s90 = sphi 0, %s87
    %s91 = sphi 0, %s90
    %s107 = sphi 0, %s91
  $region4: #{se_module.1} parent=0 // loop_header_branch
    %12 = sbr.rel (%p10) target = $region8
  $region5: #{se_module.1} parent=0 // loop_body
    %s14 = ssub.s32 %s9, 1
    %s15 = ssub.s32 %s9, 2
    %s16 = sadd.s32 %s9, 1
    %s17 = ssub.s32 %s9, %s16
    %p18 = scmp.eq.s32.totalorder %s17, 0
    %s20 = sadd.s32 %s19, 1
    %s21 = scalar_select %p18, %s19, %s20
    %p24 = pneg %p18
    %p25 = scmp.eq.s32.totalorder %s9, 1
    %p26 = por %p24, %p25
    %p27 = scmp.ne.s32.totalorder %s19, %s22
    %p28 = scmp.eq.s32.totalorder %s9, 0
    %p29 = por %p27, %p28
    %p30 = scmp.ne.s32.totalorder %s19, %s22
    %p31 = scmp.eq.s32.totalorder %s14, 1
    %p32 = por %p30, %p31
    %p33 = scmp.ne.s32.totalorder %s22, %s23
    %p34 = scmp.eq.s32.totalorder %s14, 0
    %p35 = por %p33, %p34
    %p36 = scmp.ne.s32.totalorder %s22, %s23
    %p37 = scmp.eq.s32.totalorder %s15, 1
    %p38 = por %p36, %p37
    %p40 = scmp.ne.s32.totalorder %s23, %s39
    %p41 = scmp.eq.s32.totalorder %s15, 0
    %p42 = por %p40, %p41
    %s44 = sadd.s32 %s43, 1
    %p47 = scmp.eq.s32.totalorder %s9, 1
    %p48 = scmp.ne.s32.totalorder %s43, %s45
    %p49 = scmp.eq.s32.totalorder %s9, 0
    %p50 = por %p48, %p49
    %p51 = scmp.ne.s32.totalorder %s43, %s45
    %p52 = scmp.eq.s32.totalorder %s14, 1
    %p53 = por %p51, %p52
    %p54 = scmp.ne.s32.totalorder %s45, %s46
    %p55 = scmp.eq.s32.totalorder %s14, 0
    %p56 = por %p54, %p55
    %p57 = scmp.ne.s32.totalorder %s45, %s46
    %p58 = scmp.eq.s32.totalorder %s15, 1
    %p59 = por %p57, %p58
    %p61 = scmp.ne.s32.totalorder %s46, %s60
    %p62 = scmp.eq.s32.totalorder %s15, 0
    %p63 = por %p61, %p62
    %s65 = sadd.s32 %s64, 1
    %p68 = scmp.eq.s32.totalorder %s9, 1
    %p69 = scmp.ne.s32.totalorder %s64, %s66
    %p70 = scmp.eq.s32.totalorder %s9, 0
    %p71 = por %p69, %p70
    %p72 = scmp.ne.s32.totalorder %s64, %s66
    %p73 = scmp.eq.s32.totalorder %s14, 1
    %p74 = por %p72, %p73
    %p75 = scmp.ne.s32.totalorder %s66, %s67
    %p76 = scmp.eq.s32.totalorder %s14, 0
    %p77 = por %p75, %p76
    %p78 = scmp.ne.s32.totalorder %s66, %s67
    %p79 = scmp.eq.s32.totalorder %s15, 1
    %p80 = por %p78, %p79
    %p82 = scmp.ne.s32.totalorder %s67, %s81
    %p83 = scmp.eq.s32.totalorder %s15, 0
    %p84 = por %p82, %p83
    %s85 = ssub.s32 %s9, %s16
    %p86 = scmp.eq.s32.totalorder %s85, 0
    %s88 = sadd.s32 %s87, 1
    %s89 = scalar_select %p86, %s87, %s88
    %p92 = pneg %p86
    %p93 = scmp.eq.s32.totalorder %s9, 1
    %p94 = por %p92, %p93
    %p95 = scmp.ne.s32.totalorder %s87, %s90
    %p96 = scmp.eq.s32.totalorder %s9, 0
    %p97 = por %p95, %p96
    %p98 = scmp.ne.s32.totalorder %s87, %s90
    %p99 = scmp.eq.s32.totalorder %s14, 1
    %p100 = por %p98, %p99
    %p101 = scmp.ne.s32.totalorder %s90, %s91
    %p102 = scmp.eq.s32.totalorder %s14, 0
    %p103 = por %p101, %p102
    %p104 = scmp.ne.s32.totalorder %s90, %s91
    %p105 = scmp.eq.s32.totalorder %s15, 1
    %p106 = por %p104, %p105
    %p108 = scmp.ne.s32.totalorder %s91, %s107
    %p109 = scmp.eq.s32.totalorder %s15, 0
    %p110 = por %p108, %p109
    %p111 = scmp.le.s32.totalorder 1, %s9
    %p112 = scmp.lt.s32.totalorder %s9, 3
    %p113 = pnand %p111, %p112
    %p114 = pneg %p113
    // Predicated region
    $region9: #{se_module.1} parent=5 // pred_check
      _
    $region10: #{se_module.1} parent=5 // pred_check_branch
      %116 = sbr.rel (%p113) target = $region12
    $region11: #{se_module.1} parent=5 // pred_region
      %s117 = ssub.s32 %s9, 1
      // Predicated region
      $region13: #{se_module.1} parent=11 // pred_check
        %p118 = pneg %p56
      $region14: #{se_module.1} parent=11 // pred_check_branch
        %120 = sbr.rel (%p118) target = $region16
      $region15: #{se_module.1} parent=11 // pred_region
        _
      $region16: #{se_module.1} parent=11 // pred_fallthru
        _
      // Predicated region
      $region17: #{se_module.1} parent=11 // pred_check
        %p121 = pneg %p77
      $region18: #{se_module.1} parent=11 // pred_check_branch
        %123 = sbr.rel (%p121) target = $region20
      $region19: #{se_module.1} parent=11 // pred_region
        _
      $region20: #{se_module.1} parent=11 // pred_fallthru
        _
    $region12: #{se_module.1} parent=5 // pred_fallthru
      _
    %p124 = scmp.lt.s32.totalorder %s9, 2
    // Predicated region
    $region21: #{se_module.1} parent=5 // pred_check
      %p125 = pneg %p124
    $region22: #{se_module.1} parent=5 // pred_check_branch
      %127 = sbr.rel (%p125) target = $region24
    $region23: #{se_module.1} parent=5 // pred_region
      // Predicated region
      $region25: #{se_module.1} parent=23 // pred_check
        %p128 = pneg %p29
      $region26: #{se_module.1} parent=23 // pred_check_branch
        %130 = sbr.rel (%p128) target = $region28
      $region27: #{se_module.1} parent=23 // pred_region
        %p131 = scmp.lt.s32.totalorder %s9, 1
        %s132 = scalar_select %p131, %s9, 1
        %s133 = smul.addr %s132, 32
        %s134 = smul.addr %s133, 8
        %s135 = scalar_lea.vmem %s0, %s134
      $region28: #{se_module.1} parent=23 // pred_fallthru
        _
    $region24: #{se_module.1} parent=5 // pred_fallthru
      _
    %p136 = scmp.le.s32.totalorder 1, %s9
    %p137 = scmp.lt.s32.totalorder %s9, 3
    %p138 = pnand %p136, %p137
    %p139 = pneg %p138
    // Predicated region
    $region29: #{se_module.1} parent=5 // pred_check
      _
    $region30: #{se_module.1} parent=5 // pred_check_branch
      %141 = sbr.rel (%p138) target = $region32
    $region31: #{se_module.1} parent=5 // pred_region
      %s142 = ssub.s32 %s9, 1
      %p143 = scmp.lt.s32.totalorder %s14, 1
      %s144 = scalar_select %p143, %s14, 1
      %s145 = smul.addr %s144, 32
      %s146 = smul.addr %s145, 8
      %s147 = scalar_lea.vmem %s0, %s146
      %p148 = pneg %p35
      %p149 = pneg %p32
      %p150 = pneg %p56
      %p151 = pneg %p53
      %p152 = pneg %p77
      %p153 = pneg %p74
      %p154 = pneg %p103
      %p155 = pneg %p100
      %p156 = scmp.lt.s32.totalorder %s14, 1
      %s157 = scalar_select %p156, %s14, 1
      %s158 = smul.addr %s157, 32
      %s159 = smul.addr %s158, 8
      %s160 = scalar_lea.vmem %s3, %s159
      %p161 = scmp.lt.s32.totalorder %s14, 1
      %s162 = scalar_select %p161, %s14, 1
      %s163 = smul.addr %s162, 32
      %s164 = smul.addr %s163, 8
      %s165 = scalar_lea.vmem %s0, %s164
      %p166 = scmp.lt.s32.totalorder %s14, 1
      %s167 = scalar_select %p166, %s14, 1
      %s168 = smul.addr %s167, 32
      %s169 = smul.addr %s168, 8
      %s170 = scalar_lea.vmem %s3, %s169
      %v171 = vld [vmem:[%s165] sm:$0xff]
      %v172 = vld [vmem:[%s165 + $0x8] sm:$0xff]
      %v173 = vld [vmem:[%s165 + $0x10] sm:$0xff]
      %v174 = vld [vmem:[%s165 + $0x18] sm:$0xff]
      %v175 = vld [vmem:[%s165 + $0x20] sm:$0xff]
      %v176 = vld [vmem:[%s165 + $0x28] sm:$0xff]
      %v177 = vld [vmem:[%s165 + $0x30] sm:$0xff]
      %v178 = vld [vmem:[%s165 + $0x38] sm:$0xff]
      %v179 = vld [vmem:[%s165 + $0x40] sm:$0xff]
      %v180 = vld [vmem:[%s165 + $0x48] sm:$0xff]
      %v181 = vld [vmem:[%s165 + $0x50] sm:$0xff]
      %v182 = vld [vmem:[%s165 + $0x58] sm:$0xff]
      %v183 = vld [vmem:[%s165 + $0x60] sm:$0xff]
      %v184 = vld [vmem:[%s165 + $0x68] sm:$0xff]
      %v185 = vld [vmem:[%s165 + $0x70] sm:$0xff]
      %v186 = vld [vmem:[%s165 + $0x78] sm:$0xff]
      %v187 = vld [vmem:[%s165 + $0x80] sm:$0xff]
      %v188 = vld [vmem:[%s165 + $0x88] sm:$0xff]
      %v189 = vld [vmem:[%s165 + $0x90] sm:$0xff]
      %v190 = vld [vmem:[%s165 + $0x98] sm:$0xff]
      %v191 = vld [vmem:[%s165 + $0xa0] sm:$0xff]
      %v192 = vld [vmem:[%s165 + $0xa8] sm:$0xff]
      %v193 = vld [vmem:[%s165 + $0xb0] sm:$0xff]
      %v194 = vld [vmem:[%s165 + $0xb8] sm:$0xff]
      %v195 = vld [vmem:[%s165 + $0xc0] sm:$0xff]
      %v196 = vld [vmem:[%s165 + $0xc8] sm:$0xff]
      %v197 = vld [vmem:[%s165 + $0xd0] sm:$0xff]
      %v198 = vld [vmem:[%s165 + $0xd8] sm:$0xff]
      %v199 = vld [vmem:[%s165 + $0xe0] sm:$0xff]
      %v200 = vld [vmem:[%s165 + $0xe8] sm:$0xff]
      %v201 = vld [vmem:[%s165 + $0xf0] sm:$0xff]
      %v202 = vld [vmem:[%s165 + $0xf8] sm:$0xff]
      %vm203 = vcmask 31744
      %v204 = vsel %vm203, %v171, -inf
      %v205 = vsel %vm203, %v172, -inf
      %v206 = vsel %vm203, %v173, -inf
      %v207 = vsel %vm203, %v174, -inf
      %v208 = vsel %vm203, %v175, -inf
      %v209 = vmax.f32 %v204, %v208
      %v210 = vsel %vm203, %v176, -inf
      %v211 = vmax.f32 %v205, %v210
      %v212 = vsel %vm203, %v177, -inf
      %v213 = vmax.f32 %v206, %v212
      %v214 = vsel %vm203, %v178, -inf
      %v215 = vmax.f32 %v207, %v214
      %v216 = vsel %vm203, %v179, -inf
      %v217 = vmax.f32 %v209, %v216
      %v218 = vsel %vm203, %v180, -inf
      %v219 = vmax.f32 %v211, %v218
      %v220 = vsel %vm203, %v181, -inf
      %v221 = vmax.f32 %v213, %v220
      %v222 = vsel %vm203, %v182, -inf
      %v223 = vmax.f32 %v215, %v222
      %v224 = vsel %vm203, %v183, -inf
      %v225 = vmax.f32 %v217, %v224
      %v226 = vsel %vm203, %v184, -inf
      %v227 = vmax.f32 %v219, %v226
      %v228 = vsel %vm203, %v185, -inf
      %v229 = vmax.f32 %v221, %v228
      %v230 = vsel %vm203, %v186, -inf
      %v231 = vmax.f32 %v223, %v230
      %v232 = vsel %vm203, %v187, -inf
      %v233 = vmax.f32 %v225, %v232
      %v234 = vsel %vm203, %v188, -inf
      %v235 = vmax.f32 %v227, %v234
      %v236 = vsel %vm203, %v189, -inf
      %v237 = vmax.f32 %v229, %v236
      %v238 = vsel %vm203, %v190, -inf
      %v239 = vmax.f32 %v231, %v238
      %v240 = vsel %vm203, %v191, -inf
      %v241 = vmax.f32 %v233, %v240
      %v242 = vsel %vm203, %v192, -inf
      %v243 = vmax.f32 %v235, %v242
      %v244 = vsel %vm203, %v193, -inf
      %v245 = vmax.f32 %v237, %v244
      %v246 = vsel %vm203, %v194, -inf
      %v247 = vmax.f32 %v239, %v246
      %v248 = vsel %vm203, %v195, -inf
      %v249 = vmax.f32 %v241, %v248
      %v250 = vsel %vm203, %v196, -inf
      %v251 = vmax.f32 %v243, %v250
      %v252 = vsel %vm203, %v197, -inf
      %v253 = vmax.f32 %v245, %v252
      %v254 = vsel %vm203, %v198, -inf
      %v255 = vmax.f32 %v247, %v254
      %v256 = vsel %vm203, %v199, -inf
      %v257 = vmax.f32 %v249, %v256
      %v258 = vsel %vm203, %v200, -inf
      %v259 = vmax.f32 %v251, %v258
      %v260 = vsel %vm203, %v201, -inf
      %v261 = vmax.f32 %v253, %v260
      %v262 = vsel %vm203, %v202, -inf
      %v263 = vmax.f32 %v255, %v262
      %v264 = vmax.f32 %v257, %v259
      %v265 = vmax.f32 %v261, %v263
      %v266 = vmax.f32 %v264, %v265
      %v267 = vrot.slane %v266, 4
      %v268 = vmax.f32 %v266, %v267
      %v269 = vrot.slane %v268, 2
      %v270 = vmax.f32 %v268, %v269
      %v271 = vrot.slane %v270, 1
      %v272 = vmax.f32 %v270, %v271
      %v273 = vld [vmem:[%s1] sm:$0xf]
      %v275 = vsel %vm203, %v272, 0
      %vm277 = vcmask 1043456
      %v279 = vsel %vm277, %v273, 0
      %281 = vmatprep.subr.mxu0 0.0
      %282 = vmatpush1.msra.mxu0 %v279
      %283 = vmatprep.subr.mxu0 0.0
      %284 = vmatpush1.msra.mxu0 0.0
      %285 = vmatprep.subr.mxu0 0.0
      %286 = vmatpush1.msra.mxu0 0.0
      %287 = vmatprep.subr.mxu0 0.0
      %288 = vmatpush1.msra.mxu0 0.0
      %289 = vmatprep.subr.mxu0 0.0
      %290 = vmatpush1.msra.mxu0 0.0
      %291 = vmatprep.subr.mxu0 0.0
      %292 = vmatpush1.msra.mxu0 0.0
      %293 = vmatprep.subr.mxu0 0.0
      %294 = vmatpush1.msra.mxu0 0.0
      %295 = vmatprep.subr.mxu0 0.0
      %296 = vmatpush1.msra.mxu0 0.0
      %297 = vmatprep.subr.mxu0 0.0
      %298 = vmatpush1.msra.mxu0 0.0
      %299 = vmatprep.subr.mxu0 0.0
      %300 = vmatpush1.msra.mxu0 0.0
      %301 = vmatprep.subr.mxu0 0.0
      %302 = vmatpush1.msra.mxu0 0.0
      %303 = vmatprep.subr.mxu0 0.0
      %304 = vmatpush1.msra.mxu0 0.0
      %305 = vmatprep.subr.mxu0 0.0
      %306 = vmatpush1.msra.mxu0 0.0
      %307 = vmatprep.subr.mxu0 0.0
      %308 = vmatpush1.msra.mxu0 0.0
      %309 = vmatprep.subr.mxu0 0.0
      %310 = vmatpush1.msra.mxu0 0.0
      %311 = vmatprep.subr.mxu0 0.0
      %312 = vmatpush1.msra.mxu0 0.0
      %313 = vmatprep.subr.mxu0 0.0
      %314 = vmatpush1.msra.mxu0 0.0
      %315 = vmatprep.subr.mxu0 0.0
      %316 = vmatpush1.msra.mxu0 0.0
      %317 = vmatprep.subr.mxu0 0.0
      %318 = vmatpush1.msra.mxu0 0.0
      %319 = vmatprep.subr.mxu0 0.0
      %320 = vmatpush1.msra.mxu0 0.0
      %321 = vmatprep.subr.mxu0 0.0
      %322 = vmatpush1.msra.mxu0 0.0
      %323 = vmatprep.subr.mxu0 0.0
      %324 = vmatpush1.msra.mxu0 0.0
      %325 = vmatprep.subr.mxu0 0.0
      %326 = vmatpush1.msra.mxu0 0.0
      %327 = vmatprep.subr.mxu0 0.0
      %328 = vmatpush1.msra.mxu0 0.0
      %329 = vmatprep.subr.mxu0 0.0
      %330 = vmatpush1.msra.mxu0 0.0
      %331 = vmatprep.subr.mxu0 0.0
      %332 = vmatpush1.msra.mxu0 0.0
      %333 = vmatprep.subr.mxu0 0.0
      %334 = vmatpush1.msra.mxu0 0.0
      %335 = vmatprep.subr.mxu0 0.0
      %336 = vmatpush1.msra.mxu0 0.0
      %337 = vmatprep.subr.mxu0 0.0
      %338 = vmatpush1.msra.mxu0 0.0
      %339 = vmatprep.subr.mxu0 0.0
      %340 = vmatpush1.msra.mxu0 0.0
      %341 = vmatprep.subr.mxu0 0.0
      %342 = vmatpush1.msra.mxu0 0.0
      %343 = vmatprep.subr.mxu0 0.0
      %344 = vmatpush1.msra.mxu0 0.0
      %345 = vmatprep.mubr.f32.mxu0 0.0
      %346 = vmatmul.mubr.f32.gmra.mrb[0].mxu0 %v275
      %v347 = vpop.f32.mrb[0].mxu0
      %v348 = vadd.f32 0.0, %v347
      %v349 = vpop.f32.mrb[0].mxu0
      %350 = vdwg.mxu0
      %v351 = vmax.f32 %v348, 0.0
      %v352 = vld [vmem:[%s2] sm:$0x3]
      %vm353 = vcmask 15360
      %v355 = vsel %vm353, %v351, 0
      %vm357 = vcmask 1041408
      %v359 = vsel %vm357, %v352, 0
      %361 = vmatprep.subr.mxu0 0.0
      %362 = vmatpush1.msra.mxu0 %v359
      %363 = vmatprep.subr.mxu0 0.0
      %364 = vmatpush1.msra.mxu0 0.0
      %365 = vmatprep.subr.mxu0 0.0
      %366 = vmatpush1.msra.mxu0 0.0
      %367 = vmatprep.subr.mxu0 0.0
      %368 = vmatpush1.msra.mxu0 0.0
      %369 = vmatprep.subr.mxu0 0.0
      %370 = vmatpush1.msra.mxu0 0.0
      %371 = vmatprep.subr.mxu0 0.0
      %372 = vmatpush1.msra.mxu0 0.0
      %373 = vmatprep.subr.mxu0 0.0
      %374 = vmatpush1.msra.mxu0 0.0
      %375 = vmatprep.subr.mxu0 0.0
      %376 = vmatpush1.msra.mxu0 0.0
      %377 = vmatprep.subr.mxu0 0.0
      %378 = vmatpush1.msra.mxu0 0.0
      %379 = vmatprep.subr.mxu0 0.0
      %380 = vmatpush1.msra.mxu0 0.0
      %381 = vmatprep.subr.mxu0 0.0
      %382 = vmatpush1.msra.mxu0 0.0
      %383 = vmatprep.subr.mxu0 0.0
      %384 = vmatpush1.msra.mxu0 0.0
      %385 = vmatprep.subr.mxu0 0.0
      %386 = vmatpush1.msra.mxu0 0.0
      %387 = vmatprep.subr.mxu0 0.0
      %388 = vmatpush1.msra.mxu0 0.0
      %389 = vmatprep.subr.mxu0 0.0
      %390 = vmatpush1.msra.mxu0 0.0
      %391 = vmatprep.subr.mxu0 0.0
      %392 = vmatpush1.msra.mxu0 0.0
      %393 = vmatprep.subr.mxu0 0.0
      %394 = vmatpush1.msra.mxu0 0.0
      %395 = vmatprep.subr.mxu0 0.0
      %396 = vmatpush1.msra.mxu0 0.0
      %397 = vmatprep.subr.mxu0 0.0
      %398 = vmatpush1.msra.mxu0 0.0
      %399 = vmatprep.subr.mxu0 0.0
      %400 = vmatpush1.msra.mxu0 0.0
      %401 = vmatprep.subr.mxu0 0.0
      %402 = vmatpush1.msra.mxu0 0.0
      %403 = vmatprep.subr.mxu0 0.0
      %404 = vmatpush1.msra.mxu0 0.0
      %405 = vmatprep.subr.mxu0 0.0
      %406 = vmatpush1.msra.mxu0 0.0
      %407 = vmatprep.subr.mxu0 0.0
      %408 = vmatpush1.msra.mxu0 0.0
      %409 = vmatprep.subr.mxu0 0.0
      %410 = vmatpush1.msra.mxu0 0.0
      %411 = vmatprep.subr.mxu0 0.0
      %412 = vmatpush1.msra.mxu0 0.0
      %413 = vmatprep.subr.mxu0 0.0
      %414 = vmatpush1.msra.mxu0 0.0
      %415 = vmatprep.subr.mxu0 0.0
      %416 = vmatpush1.msra.mxu0 0.0
      %417 = vmatprep.subr.mxu0 0.0
      %418 = vmatpush1.msra.mxu0 0.0
      %419 = vmatprep.subr.mxu0 0.0
      %420 = vmatpush1.msra.mxu0 0.0
      %421 = vmatprep.subr.mxu0 0.0
      %422 = vmatpush1.msra.mxu0 0.0
      %423 = vmatprep.subr.mxu0 0.0
      %424 = vmatpush1.msra.mxu0 0.0
      %425 = vmatprep.mubr.f32.mxu0 0.0
      %426 = vmatmul.mubr.f32.gmra.mrb[0].mxu0 %v355
      %v427 = vpop.f32.mrb[0].mxu0
      %v428 = vadd.f32 0.0, %v427
      %v429 = vpop.f32.mrb[0].mxu0
      %430 = vdwg.mxu0
      %v431 = vxor.u32 %v428, 2147483648
      %v432 = vmul.f32 %v431, 1.442695
      %v433 = vpow.pop %v432
      %v434 = vadd.f32 %v433, 1.0
      %v435 = vrcp.pop %v434
      %v436 = vmul.f32 1.0, %v435
      %v437 = vlaneseq
      %v438 = vshrl.u32 %v437, 7
      %v439 = vsub.s32 0, %v438
      %v440 = vrot.slane %v436, %v439
      %v441 = vmul.f32 %v171, %v440
      %v442 = vmul.f32 %v172, %v440
      %v443 = vmul.f32 %v173, %v440
      %v444 = vmul.f32 %v174, %v440
      %v445 = vmul.f32 %v175, %v440
      %v446 = vmul.f32 %v176, %v440
      %v447 = vmul.f32 %v177, %v440
      %v448 = vmul.f32 %v178, %v440
      %v449 = vmul.f32 %v179, %v440
      %v450 = vmul.f32 %v180, %v440
      %v451 = vmul.f32 %v181, %v440
      %v452 = vmul.f32 %v182, %v440
      %v453 = vmul.f32 %v183, %v440
      %v454 = vmul.f32 %v184, %v440
      %v455 = vmul.f32 %v185, %v440
      %v456 = vmul.f32 %v186, %v440
      %v457 = vmul.f32 %v187, %v440
      %v458 = vmul.f32 %v188, %v440
      %v459 = vmul.f32 %v189, %v440
      %v460 = vmul.f32 %v190, %v440
      %v461 = vmul.f32 %v191, %v440
      %v462 = vmul.f32 %v192, %v440
      %v463 = vmul.f32 %v193, %v440
      %v464 = vmul.f32 %v194, %v440
      %v465 = vmul.f32 %v195, %v440
      %v466 = vmul.f32 %v196, %v440
      %v467 = vmul.f32 %v197, %v440
      %v468 = vmul.f32 %v198, %v440
      %v469 = vmul.f32 %v199, %v440
      %v470 = vmul.f32 %v200, %v440
      %v471 = vmul.f32 %v201, %v440
      %v472 = vmul.f32 %v202, %v440
      %473 = vst.msk [vmem:[%s170] sm:$0xff] %vm203, %v441
      %474 = vst.msk [vmem:[%s170 + $0x8] sm:$0xff] %vm203, %v442
      %475 = vst.msk [vmem:[%s170 + $0x10] sm:$0xff] %vm203, %v443
      %476 = vst.msk [vmem:[%s170 + $0x18] sm:$0xff] %vm203, %v444
      %477 = vst.msk [vmem:[%s170 + $0x20] sm:$0xff] %vm203, %v445
      %478 = vst.msk [vmem:[%s170 + $0x28] sm:$0xff] %vm203, %v446
      %479 = vst.msk [vmem:[%s170 + $0x30] sm:$0xff] %vm203, %v447
      %480 = vst.msk [vmem:[%s170 + $0x38] sm:$0xff] %vm203, %v448
      %481 = vst.msk [vmem:[%s170 + $0x40] sm:$0xff] %vm203, %v449
      %482 = vst.msk [vmem:[%s170 + $0x48] sm:$0xff] %vm203, %v450
      %483 = vst.msk [vmem:[%s170 + $0x50] sm:$0xff] %vm203, %v451
      %484 = vst.msk [vmem:[%s170 + $0x58] sm:$0xff] %vm203, %v452
      %485 = vst.msk [vmem:[%s170 + $0x60] sm:$0xff] %vm203, %v453
      %486 = vst.msk [vmem:[%s170 + $0x68] sm:$0xff] %vm203, %v454
      %487 = vst.msk [vmem:[%s170 + $0x70] sm:$0xff] %vm203, %v455
      %488 = vst.msk [vmem:[%s170 + $0x78] sm:$0xff] %vm203, %v456
      %489 = vst.msk [vmem:[%s170 + $0x80] sm:$0xff] %vm203, %v457
      %490 = vst.msk [vmem:[%s170 + $0x88] sm:$0xff] %vm203, %v458
      %491 = vst.msk [vmem:[%s170 + $0x90] sm:$0xff] %vm203, %v459
      %492 = vst.msk [vmem:[%s170 + $0x98] sm:$0xff] %vm203, %v460
      %493 = vst.msk [vmem:[%s170 + $0xa0] sm:$0xff] %vm203, %v461
      %494 = vst.msk [vmem:[%s170 + $0xa8] sm:$0xff] %vm203, %v462
      %495 = vst.msk [vmem:[%s170 + $0xb0] sm:$0xff] %vm203, %v463
      %496 = vst.msk [vmem:[%s170 + $0xb8] sm:$0xff] %vm203, %v464
      %497 = vst.msk [vmem:[%s170 + $0xc0] sm:$0xff] %vm203, %v465
      %498 = vst.msk [vmem:[%s170 + $0xc8] sm:$0xff] %vm203, %v466
      %499 = vst.msk [vmem:[%s170 + $0xd0] sm:$0xff] %vm203, %v467
      %500 = vst.msk [vmem:[%s170 + $0xd8] sm:$0xff] %vm203, %v468
      %501 = vst.msk [vmem:[%s170 + $0xe0] sm:$0xff] %vm203, %v469
      %502 = vst.msk [vmem:[%s170 + $0xe8] sm:$0xff] %vm203, %v470
      %503 = vst.msk [vmem:[%s170 + $0xf0] sm:$0xff] %vm203, %v471
      %504 = vst.msk [vmem:[%s170 + $0xf8] sm:$0xff] %vm203, %v472
      %p505 = scmp.lt.s32.totalorder %s14, 1
      %s506 = scalar_select %p505, %s14, 1
      %s507 = smul.addr %s506, 32
      %s508 = smul.addr %s507, 8
      %s509 = scalar_lea.vmem %s3, %s508
      // Predicated region
      $region33: #{se_module.1} parent=31 // pred_check
        %p510 = pneg %p100
      $region34: #{se_module.1} parent=31 // pred_check_branch
        %512 = sbr.rel (%p510) target = $region36
      $region35: #{se_module.1} parent=31 // pred_region
        _
      $region36: #{se_module.1} parent=31 // pred_fallthru
        _
    $region32: #{se_module.1} parent=5 // pred_fallthru
      _
    %p513 = scmp.le.s32.totalorder 2, %s9
    // Predicated region
    $region37: #{se_module.1} parent=5 // pred_check
      %p514 = pneg %p513
    $region38: #{se_module.1} parent=5 // pred_check_branch
      %516 = sbr.rel (%p514) target = $region40
    $region39: #{se_module.1} parent=5 // pred_region
      %s517 = ssub.s32 %s9, 2
      // Predicated region
      $region41: #{se_module.1} parent=39 // pred_check
        %p518 = pneg %p106
      $region42: #{se_module.1} parent=39 // pred_check_branch
        %520 = sbr.rel (%p518) target = $region44
      $region43: #{se_module.1} parent=39 // pred_region
        %p521 = scmp.lt.s32.totalorder %s15, 1
        %s522 = scalar_select %p521, %s15, 1
        %s523 = smul.addr %s522, 32
        %s524 = smul.addr %s523, 8
        %s525 = scalar_lea.vmem %s3, %s524
      $region44: #{se_module.1} parent=39 // pred_fallthru
        _
    $region40: #{se_module.1} parent=5 // pred_fallthru
      _
  $region6: #{se_module.1} parent=0 // loop_footer
    %s13 = sadd.s32 1, %s9
  $region7: #{se_module.1} parent=0 // loop_footer_branch
    %8 = sbr.rel target = $region3
  $region8: #{se_module.1} parent=0 // loop_exit
    _

</llo_original>
